<compile_context>
chip_gen: v5e
topology: v5e:2x2
jax: 0.10.0
libtpu: 0.0.40
codegen_flags: <defaults>
</compile_context>

<pallas_src>
import jax
import jax.numpy as jnp
from jax.experimental import pallas as pl
from jax.experimental.pallas import tpu as pltpu

LANE_CHOICES = (1024, 512, 256, 128)   # widest lane-dense last dim dividing the half
TARGET_BLOCK_BYTES = 3 * 1024 * 1024   # ~3 MiB per block buffer (x6 buffered ≈ 18 MiB)
VMEM_LIMIT_BYTES = 32 * 1024 * 1024    # safe on v5e/v6e (128 MiB) and v7x (64 MiB)


def _round_up(x, m):
    return (x + m - 1) // m * m


# ---------------- Pallas kernel ----------------

def _glu_kernel(a_ref, b_ref, o_ref):
    # out = a * sigmoid(b): exp on the EUP, exact reciprocal, multiply on VPU.
    a = a_ref[...].astype(jnp.float32)
    b = b_ref[...].astype(jnp.float32)
    sig = pl.reciprocal(1.0 + jnp.exp(-b), approx=False)
    o_ref[...] = (a * sig).astype(o_ref.dtype)


def _pick_tile_rows(rows, lane, itemsize, other_programs):
    """Rows per block: ~TARGET_BLOCK_BYTES, sublane-aligned, >=2 programs when useful."""
    packing = max(1, 4 // itemsize)    # f32 -> 1, bf16 -> 2, int8/fp8 -> 4
    sub = 8 * packing                  # sublane multiple for this dtype
    tm = max(1, TARGET_BLOCK_BYTES // (lane * itemsize))
    if tm >= rows:
        tm = rows                      # full-dim escape hatch (any size allowed)
    else:
        tm = max(sub, (tm // sub) * sub)
    # Ensure v7x's two TensorCores both get a program when there is enough work.
    if other_programs * (-(-rows // tm)) < 2 and rows >= 2 * sub:
        tm = _round_up(-(-rows // 2), sub)
    return tm


# ---------------- wrapper ----------------

def glu(x):
    """GLU over dim 1 of an N-D array (N >= 2), matching the PyTorch module."""
    c = x.shape[1]
    assert c % 2 == 0, "channels dont divide 2!"
    nc = c // 2
    bsz = x.shape[0]
    spatial = tuple(x.shape[2:])
    m = 1
    for s in spatial:
        m *= s
    k = nc * m                          # flat size of one channel half, per batch
    n_out = bsz * k
    dtype = x.dtype
    itemsize = dtype.itemsize
    out_shape = (bsz, nc) + spatial

    cost = pl.CostEstimate(flops=2 * n_out, transcendentals=n_out,
                           bytes_accessed=3 * n_out * itemsize)

    if k % 128 == 0:
        # ---- Primary, zero-copy path -------------------------------------
        # x.reshape(B, 2, R, L) is a contiguous reinterpret (no HBM copy):
        # [:, 0] is the first channel half, [:, 1] the second.  The same
        # array is fed twice with channel-offset index_maps, so only the
        # minimal ~1.5N bytes move (read x once, write out once).
        lane = next(l for l in LANE_CHOICES if k % l == 0)
        rows = k // lane
        tm = _pick_tile_rows(rows, lane, itemsize, bsz)
        nrb = -(-rows // tm)
        x4 = x.reshape(bsz, 2, rows, lane)

        out = pl.pallas_call(
            _glu_kernel,
            out_shape=jax.ShapeDtypeStruct((bsz, rows, lane), dtype),
            grid=(bsz, nrb),
            in_specs=[
                pl.BlockSpec((None, None, tm, lane), lambda i, j: (i, 0, j, 0)),
                pl.BlockSpec((None, None, tm, lane), lambda i, j: (i, 1, j, 0)),
            ],
            out_specs=pl.BlockSpec((None, tm, lane), lambda i, j: (i, j, 0)),
            compiler_params=pltpu.CompilerParams(
                dimension_semantics=("parallel", "parallel"),
                vmem_limit_bytes=VMEM_LIMIT_BYTES),
            cost_estimate=cost,
        )(x4, x4)
        return out.reshape(out_shape)

    # ---- Fallback (half size not a multiple of 128) -----------------------
    # Stages padded lane-dense copies of the two halves (extra HBM traffic);
    # only hit for odd shapes where no aligned zero-copy view exists.
    a = x[:, :nc].reshape(-1)
    b = x[:, nc:].reshape(-1)
    lane = 512 if n_out >= 512 else 128
    rows = -(-n_out // lane)
    pad = rows * lane - n_out
    if pad:
        a = jnp.pad(a, (0, pad))
        b = jnp.pad(b, (0, pad))
    a2 = a.reshape(rows, lane)
    b2 = b.reshape(rows, lane)
    tm = _pick_tile_rows(rows, lane, itemsize, 1)
    nrb = -(-rows // tm)

    out = pl.pallas_call(
        _glu_kernel,
        out_shape=jax.ShapeDtypeStruct((rows, lane), dtype),
        grid=(nrb,),
        in_specs=[pl.BlockSpec((tm, lane), lambda i: (i, 0)),
                  pl.BlockSpec((tm, lane), lambda i: (i, 0))],
        out_specs=pl.BlockSpec((tm, lane), lambda i: (i, 0)),
        compiler_params=pltpu.CompilerParams(
            dimension_semantics=("parallel",),
            vmem_limit_bytes=VMEM_LIMIT_BYTES),
        cost_estimate=cost,
    )(a2, b2)
    return out.reshape(-1)[:n_out].reshape(out_shape)


# ---------------- test ----------------

def _ref_glu(x):
    nc = x.shape[1] // 2
    return x[:, :nc] * jax.nn.sigmoid(x[:, nc:])


if __name__ == "__main__":
    key = jax.random.PRNGKey(0)
    k1, k2 = jax.random.split(key)

    # Main case: NCHW activation, channels divisible by 2 (zero-copy path).
    x = jax.random.normal(k1, (2, 4, 16, 16), jnp.float32)
    out = jax.jit(glu)(x)
    jax.block_until_ready(out)
    ref = _ref_glu(x)
    assert out.shape == (2, 2, 16, 16), out.shape
    assert bool(jnp.all(jnp.isfinite(out)))
    assert bool(jnp.allclose(out, ref, atol=1e-6, rtol=1e-6))

    # Odd-sized case exercising the padded fallback path.
    y = jax.random.normal(k2, (3, 6, 7, 5), jnp.float32)
    out_y = jax.jit(glu)(y)
    jax.block_until_ready(out_y)
    ref_y = _ref_glu(y)
    assert out_y.shape == (3, 3, 7, 5), out_y.shape
    assert bool(jnp.allclose(out_y, ref_y, atol=1e-6, rtol=1e-6))

    print("KERNEL_OK")
</pallas_src>

<mosaic_0001>
module attributes {stable_mosaic.version = 11 : i64} {
  func.func @_glu_kernel(%arg0: i32, %arg1: i32, %arg2: memref<1x1x1x512xf32, #tpu.memory_space<vmem>>, %arg3: memref<1x1x1x512xf32, #tpu.memory_space<vmem>>, %arg4: memref<1x1x512xf32, #tpu.memory_space<vmem>>) attributes {dimension_semantics = [#tpu.dimension_semantics<parallel>, #tpu.dimension_semantics<parallel>], iteration_bounds = array<i64: 2, 1>, scalar_prefetch = 0 : i64, scratch_operands = 0 : i64, tpu.core_type = #tpu.core_type<tc>, window_params = [{transform_indices = @transform_0, window_bounds = array<i64: 1, 1, 1, 512>}, {transform_indices = @transform_1, window_bounds = array<i64: 1, 1, 1, 512>}, {transform_indices = @transform_2, window_bounds = array<i64: 1, 1, 512>}]} {
    %c0 = arith.constant 0 : index
    %c0_0 = arith.constant 0 : index
    %c0_1 = arith.constant 0 : index
    %c0_2 = arith.constant 0 : index
    %0 = vector.load %arg2[%c0, %c0_0, %c0_1, %c0_2] : memref<1x1x1x512xf32, #tpu.memory_space<vmem>>, vector<1x1x1x512xf32>
    %1 = vector.shape_cast %0 : vector<1x1x1x512xf32> to vector<1x512xf32>
    %c0_3 = arith.constant 0 : index
    %c0_4 = arith.constant 0 : index
    %c0_5 = arith.constant 0 : index
    %c0_6 = arith.constant 0 : index
    %2 = vector.load %arg3[%c0_3, %c0_4, %c0_5, %c0_6] : memref<1x1x1x512xf32, #tpu.memory_space<vmem>>, vector<1x1x1x512xf32>
    %3 = vector.shape_cast %2 : vector<1x1x1x512xf32> to vector<1x512xf32>
    %cst = arith.constant 0.000000e+00 : f32
    %4 = vector.broadcast %cst : f32 to vector<1x512xf32>
    %5 = arith.subf %4, %3 : vector<1x512xf32>
    %6 = math.exp %5 : vector<1x512xf32>
    %cst_7 = arith.constant 1.000000e+00 : f32
    %7 = vector.broadcast %cst_7 : f32 to vector<1x512xf32>
    %8 = arith.addf %7, %6 : vector<1x512xf32>
    %9 = tpu.reciprocal %8 : vector<1x512xf32> -> vector<1x512xf32>
    %10 = arith.mulf %1, %9 : vector<1x512xf32>
    %c0_8 = arith.constant 0 : index
    %c0_9 = arith.constant 0 : index
    %c0_10 = arith.constant 0 : index
    %11 = vector.load %arg4[%c0_8, %c0_9, %c0_10] : memref<1x1x512xf32, #tpu.memory_space<vmem>>, vector<1x1x512xf32>
    %12 = vector.shape_cast %11 : vector<1x1x512xf32> to vector<1x512xf32>
    %13 = vector.shape_cast %10 : vector<1x512xf32> to vector<1x1x512xf32>
    tpu.vector_store %arg4[%c0_8, %c0_9, %c0_10], %13 {strides = array<i32>} : memref<1x1x512xf32, #tpu.memory_space<vmem>>, vector<1x1x512xf32>,
    return
  }
  func.func @transform_0(%arg0: i32, %arg1: i32) -> (i32, i32, i32, i32) {
    %c0_i32 = arith.constant 0 : i32
    %c0_i32_0 = arith.constant 0 : i32
    %c0_i32_1 = arith.constant 0 : i32
    return %arg0, %c0_i32, %arg1, %c0_i32_0 : i32, i32, i32, i32
  }
  func.func @transform_1(%arg0: i32, %arg1: i32) -> (i32, i32, i32, i32) {
    %c1_i32 = arith.constant 1 : i32
    %c0_i32 = arith.constant 0 : i32
    %c0_i32_0 = arith.constant 0 : i32
    return %arg0, %c1_i32, %arg1, %c0_i32 : i32, i32, i32, i32
  }
  func.func @transform_2(%arg0: i32, %arg1: i32) -> (i32, i32, i32) {
    %c0_i32 = arith.constant 0 : i32
    %c0_i32_0 = arith.constant 0 : i32
    return %arg0, %arg1, %c0_i32 : i32, i32, i32
  }
}

</mosaic_0001>

<llo_original>
// kernel: glu.1
$region0: #{glu.1}
  #allocation0 [shape = 'u32[]', space=smem, size = 0x4, offset = 0x4, fixed_abs, tag = 'smem constant byte address 0x4 - core index']
  #allocation1 [shape = 'u32[72,128]{1,0:T(1,128)}', space=vmem, size = 0x9000, scoped, tag = 'internal scratch']
  %s0 = inlined_call_operand.vmem [shape: f32[2,2,1,512], index: 0, kind: input, shape index: {}, may-alias: {0,1}]
  %s1 = inlined_call_operand.vmem [shape: f32[2,2,1,512], index: 1, kind: input, shape index: {}, may-alias: {0,1}]
  %s2 = inlined_call_operand.vmem [shape: f32[2,1,512], index: 2, kind: output, shape index: {}]
  %s3 = sld [smem:[#allocation0]]
  $region41: #{glu.1} parent=0
    _
  %s5 = ssub.s32 1, %s3
  %s6 = scalar_select 0, %s5, %s3
  loop: start=0, step=1, limit=4
  $region2: #{glu.1} parent=0 // loop_pre_header
    _
  $region3: #{glu.1} parent=0 // loop_header
    %s8 = sphi 0, %s12
    %p9 = scmp.ge.s32.totalorder %s8, 4
    %s15 = sphi 0, %s27
    %s16 = sphi 0, %s23
    %s17 = sphi 0, %s15
    %s18 = sphi 0, %s16
    %s19 = sphi 0, %s17
    %s20 = sphi 0, %s18
    %s32 = sphi 0, %s34
    %s35 = sphi 0, %s32
    %s36 = sphi 0, %s35
    %s52 = sphi 0, %s36
    %s60 = sphi 0, %s62
    %s63 = sphi 0, %s60
    %s64 = sphi 0, %s63
    %s80 = sphi 0, %s64
    %s88 = sphi 0, %s90
    %s91 = sphi 0, %s88
    %s92 = sphi 0, %s91
    %s108 = sphi 0, %s92
  $region4: #{glu.1} parent=0 // loop_header_branch
    %11 = sbr.rel (%p9) target = $region8
  $region5: #{glu.1} parent=0 // loop_body
    %s13 = ssub.s32 %s8, 1
    %s14 = ssub.s32 %s8, 2
    %s21 = sadd.s32 1, %s16
    %p22 = scmp.ge.s32.totalorder %s21, 1
    %s23 = scalar_select %p22, 0, %s21
    %s24 = sadd.s32 1, %s15
    %s25 = scalar_select %p22, %s24, %s15
    %p26 = scmp.ge.s32.totalorder %s25, 2
    %s27 = scalar_select %p26, 0, %s25
    %s28 = ssub.s32 %s15, %s27
    %s29 = ssub.s32 %s16, %s23
    %s30 = sor.u32 %s28, %s29
    %p31 = scmp.eq.s32.totalorder %s30, 0
    %s33 = sadd.s32 %s32, 1
    %s34 = scalar_select %p31, %s32, %s33
    %p37 = pneg %p31
    %p38 = scmp.eq.s32.totalorder %s8, 1
    %p39 = por %p37, %p38
    %p40 = scmp.ne.s32.totalorder %s32, %s35
    %p41 = scmp.eq.s32.totalorder %s8, 0
    %p42 = por %p40, %p41
    %p43 = scmp.ne.s32.totalorder %s32, %s35
    %p44 = scmp.eq.s32.totalorder %s13, 1
    %p45 = por %p43, %p44
    %p46 = scmp.ne.s32.totalorder %s35, %s36
    %p47 = scmp.eq.s32.totalorder %s13, 0
    %p48 = por %p46, %p47
    %p49 = scmp.ne.s32.totalorder %s35, %s36
    %p50 = scmp.eq.s32.totalorder %s14, 1
    %p51 = por %p49, %p50
    %p53 = scmp.ne.s32.totalorder %s36, %s52
    %p54 = scmp.eq.s32.totalorder %s14, 0
    %p55 = por %p53, %p54
    %s56 = ssub.s32 %s15, %s27
    %s57 = ssub.s32 %s16, %s23
    %s58 = sor.u32 %s56, %s57
    %p59 = scmp.eq.s32.totalorder %s58, 0
    %s61 = sadd.s32 %s60, 1
    %s62 = scalar_select %p59, %s60, %s61
    %p65 = pneg %p59
    %p66 = scmp.eq.s32.totalorder %s8, 1
    %p67 = por %p65, %p66
    %p68 = scmp.ne.s32.totalorder %s60, %s63
    %p69 = scmp.eq.s32.totalorder %s8, 0
    %p70 = por %p68, %p69
    %p71 = scmp.ne.s32.totalorder %s60, %s63
    %p72 = scmp.eq.s32.totalorder %s13, 1
    %p73 = por %p71, %p72
    %p74 = scmp.ne.s32.totalorder %s63, %s64
    %p75 = scmp.eq.s32.totalorder %s13, 0
    %p76 = por %p74, %p75
    %p77 = scmp.ne.s32.totalorder %s63, %s64
    %p78 = scmp.eq.s32.totalorder %s14, 1
    %p79 = por %p77, %p78
    %p81 = scmp.ne.s32.totalorder %s64, %s80
    %p82 = scmp.eq.s32.totalorder %s14, 0
    %p83 = por %p81, %p82
    %s84 = ssub.s32 %s15, %s27
    %s85 = ssub.s32 %s16, %s23
    %s86 = sor.u32 %s84, %s85
    %p87 = scmp.eq.s32.totalorder %s86, 0
    %s89 = sadd.s32 %s88, 1
    %s90 = scalar_select %p87, %s88, %s89
    %p93 = pneg %p87
    %p94 = scmp.eq.s32.totalorder %s8, 1
    %p95 = por %p93, %p94
    %p96 = scmp.ne.s32.totalorder %s88, %s91
    %p97 = scmp.eq.s32.totalorder %s8, 0
    %p98 = por %p96, %p97
    %p99 = scmp.ne.s32.totalorder %s88, %s91
    %p100 = scmp.eq.s32.totalorder %s13, 1
    %p101 = por %p99, %p100
    %p102 = scmp.ne.s32.totalorder %s91, %s92
    %p103 = scmp.eq.s32.totalorder %s13, 0
    %p104 = por %p102, %p103
    %p105 = scmp.ne.s32.totalorder %s91, %s92
    %p106 = scmp.eq.s32.totalorder %s14, 1
    %p107 = por %p105, %p106
    %p109 = scmp.ne.s32.totalorder %s92, %s108
    %p110 = scmp.eq.s32.totalorder %s14, 0
    %p111 = por %p109, %p110
    %p112 = scmp.le.s32.totalorder 1, %s8
    %p113 = scmp.lt.s32.totalorder %s8, 3
    %p114 = pnand %p112, %p113
    %p115 = pneg %p114
    // Predicated region
    $region9: #{glu.1} parent=5 // pred_check
      _
    $region10: #{glu.1} parent=5 // pred_check_branch
      %117 = sbr.rel (%p114) target = $region12
    $region11: #{glu.1} parent=5 // pred_region
      %s118 = ssub.s32 %s8, 1
    $region12: #{glu.1} parent=5 // pred_fallthru
      _
    %p119 = scmp.lt.s32.totalorder %s8, 2
    // Predicated region
    $region13: #{glu.1} parent=5 // pred_check
      %p120 = pneg %p119
    $region14: #{glu.1} parent=5 // pred_check_branch
      %122 = sbr.rel (%p120) target = $region16
    $region15: #{glu.1} parent=5 // pred_region
      // Predicated region
      $region17: #{glu.1} parent=15 // pred_check
        %p123 = pneg %p42
      $region18: #{glu.1} parent=15 // pred_check_branch
        %125 = sbr.rel (%p123) target = $region20
      $region19: #{glu.1} parent=15 // pred_region
        %p126 = scmp.lt.s32.totalorder %s15, 1
        %s127 = scalar_select %p126, %s15, 1
        %p128 = scmp.lt.s32.totalorder %s16, 0
        %s129 = scalar_select %p128, %s16, 0
        %s130 = smul.addr %s129, 4
        %s131 = smul.addr %s127, 8
        %s132 = sadd.s32 %s130, %s131
        %s133 = scalar_lea.vmem %s0, %s132
      $region20: #{glu.1} parent=15 // pred_fallthru
        _
      // Predicated region
      $region21: #{glu.1} parent=15 // pred_check
        %p134 = pneg %p70
      $region22: #{glu.1} parent=15 // pred_check_branch
        %136 = sbr.rel (%p134) target = $region24
      $region23: #{glu.1} parent=15 // pred_region
        %p137 = scmp.lt.s32.totalorder %s15, 1
        %s138 = scalar_select %p137, %s15, 1
        %p139 = scmp.lt.s32.totalorder %s16, 0
        %s140 = scalar_select %p139, %s16, 0
        %s141 = smul.addr %s140, 4
        %s142 = sadd.s32 %s141, 4
        %s143 = smul.addr %s138, 8
        %s144 = sadd.s32 %s142, %s143
        %s145 = scalar_lea.vmem %s1, %s144
      $region24: #{glu.1} parent=15 // pred_fallthru
        _
    $region16: #{glu.1} parent=5 // pred_fallthru
      _
    %p146 = scmp.le.s32.totalorder 1, %s8
    %p147 = scmp.lt.s32.totalorder %s8, 3
    %p148 = pnand %p146, %p147
    %p149 = pneg %p148
    // Predicated region
    $region25: #{glu.1} parent=5 // pred_check
      _
    $region26: #{glu.1} parent=5 // pred_check_branch
      %151 = sbr.rel (%p148) target = $region28
    $region27: #{glu.1} parent=5 // pred_region
      %s152 = ssub.s32 %s8, 1
      %p153 = scmp.lt.s32.totalorder %s17, 1
      %s154 = scalar_select %p153, %s17, 1
      %p155 = scmp.lt.s32.totalorder %s18, 0
      %s156 = scalar_select %p155, %s18, 0
      %s157 = smul.addr %s156, 4
      %s158 = smul.addr %s154, 8
      %s159 = sadd.s32 %s157, %s158
      %s160 = scalar_lea.vmem %s0, %s159
      %p161 = pneg %p48
      %p162 = pneg %p45
      %p163 = scmp.lt.s32.totalorder %s17, 1
      %s164 = scalar_select %p163, %s17, 1
      %p165 = scmp.lt.s32.totalorder %s18, 0
      %s166 = scalar_select %p165, %s18, 0
      %s167 = smul.addr %s166, 4
      %s168 = sadd.s32 %s167, 4
      %s169 = smul.addr %s164, 8
      %s170 = sadd.s32 %s168, %s169
      %s171 = scalar_lea.vmem %s1, %s170
      %p172 = pneg %p76
      %p173 = pneg %p73
      %p174 = pneg %p104
      %p175 = pneg %p101
      %p176 = scmp.lt.s32.totalorder %s17, 1
      %s177 = scalar_select %p176, %s17, 1
      %p178 = scmp.lt.s32.totalorder %s18, 0
      %s179 = scalar_select %p178, %s18, 0
      %s180 = smul.addr %s179, 4
      %s181 = smul.addr %s177, 4
      %s182 = sadd.s32 %s180, %s181
      %s183 = scalar_lea.vmem %s2, %s182
      %p184 = scmp.lt.s32.totalorder %s17, 1
      %s185 = scalar_select %p184, %s17, 1
      %p186 = scmp.lt.s32.totalorder %s18, 0
      %s187 = scalar_select %p186, %s18, 0
      %s188 = smul.addr %s187, 4
      %s189 = smul.addr %s185, 8
      %s190 = sadd.s32 %s188, %s189
      %s191 = scalar_lea.vmem %s0, %s190
      %p192 = scmp.lt.s32.totalorder %s17, 1
      %s193 = scalar_select %p192, %s17, 1
      %p194 = scmp.lt.s32.totalorder %s18, 0
      %s195 = scalar_select %p194, %s18, 0
      %s196 = smul.addr %s195, 4
      %s197 = sadd.s32 %s196, 4
      %s198 = smul.addr %s193, 8
      %s199 = sadd.s32 %s197, %s198
      %s200 = scalar_lea.vmem %s1, %s199
      %p201 = scmp.lt.s32.totalorder %s17, 1
      %s202 = scalar_select %p201, %s17, 1
      %p203 = scmp.lt.s32.totalorder %s18, 0
      %s204 = scalar_select %p203, %s18, 0
      %s205 = smul.addr %s204, 4
      %s206 = smul.addr %s202, 4
      %s207 = sadd.s32 %s205, %s206
      %s208 = scalar_lea.vmem %s2, %s207
      %v209 = vld [vmem:[%s191] sm:$0xf]
      %v210 = vld [vmem:[%s200] sm:$0xf]
      %v211 = vsub.f32 0.0, %v210
      %v212 = vmul.f32 %v211, 1.442695
      %v213 = vpow.pop %v212
      %v214 = vadd.f32 %v213, 1.0
      %v215 = vrcp.pop %v214
      %v216 = vmul.f32 %v214, %v215
      %v217 = vsub.f32 1.0, %v216
      %v218 = vmul.f32 %v215, %v217
      %v219 = vadd.f32 %v215, %v218
      %vm220 = vweird.f32 %v214
      %vm221 = vweird.f32 %v215
      %vm222 = vmor %vm220, %vm221
      %v223 = vsel %vm222, %v215, %v219
      %v224 = vand.u32 2147483647, %v214
      %vm225 = vcmp.eq.f32.partialorder %v224, 8.507059e+37
      %v226 = vand.u32 %v214, 2147483648
      %v227 = vor.u32 1.1754944e-38, %v226
      %v228 = vsel %vm225, %v227, %v223
      %v229 = vmul.f32 %v209, %v228
      %v230 = vlaneseq
      %vm231 = vcmp.ge.s32.totalorder %v230, 0
      %vm232 = vcmp.lt.s32.totalorder %v230, 512
      %vm233 = vmand %vm231, %vm232
      %234 = vst.msk [vmem:[%s208] sm:$0xf] %vm233, %v229
      %p235 = scmp.lt.s32.totalorder %s17, 1
      %s236 = scalar_select %p235, %s17, 1
      %p237 = scmp.lt.s32.totalorder %s18, 0
      %s238 = scalar_select %p237, %s18, 0
      %s239 = smul.addr %s238, 4
      %s240 = smul.addr %s236, 4
      %s241 = sadd.s32 %s239, %s240
      %s242 = scalar_lea.vmem %s2, %s241
      // Predicated region
      $region29: #{glu.1} parent=27 // pred_check
        %p243 = pneg %p101
      $region30: #{glu.1} parent=27 // pred_check_branch
        %245 = sbr.rel (%p243) target = $region32
      $region31: #{glu.1} parent=27 // pred_region
        _
      $region32: #{glu.1} parent=27 // pred_fallthru
        _
    $region28: #{glu.1} parent=5 // pred_fallthru
      _
    %p246 = scmp.le.s32.totalorder 2, %s8
    // Predicated region
    $region33: #{glu.1} parent=5 // pred_check
      %p247 = pneg %p246
    $region34: #{glu.1} parent=5 // pred_check_branch
      %249 = sbr.rel (%p247) target = $region36
    $region35: #{glu.1} parent=5 // pred_region
      %s250 = ssub.s32 %s8, 2
      // Predicated region
      $region37: #{glu.1} parent=35 // pred_check
        %p251 = pneg %p107
      $region38: #{glu.1} parent=35 // pred_check_branch
        %253 = sbr.rel (%p251) target = $region40
      $region39: #{glu.1} parent=35 // pred_region
        %p254 = scmp.lt.s32.totalorder %s19, 1
        %s255 = scalar_select %p254, %s19, 1
        %p256 = scmp.lt.s32.totalorder %s20, 0
        %s257 = scalar_select %p256, %s20, 0
        %s258 = smul.addr %s257, 4
        %s259 = smul.addr %s255, 4
        %s260 = sadd.s32 %s258, %s259
        %s261 = scalar_lea.vmem %s2, %s260
      $region40: #{glu.1} parent=35 // pred_fallthru
        _
    $region36: #{glu.1} parent=5 // pred_fallthru
      _
  $region6: #{glu.1} parent=0 // loop_footer
    %s12 = sadd.s32 1, %s8
  $region7: #{glu.1} parent=0 // loop_footer_branch
    %7 = sbr.rel target = $region3
  $region8: #{glu.1} parent=0 // loop_exit
    _

</llo_original>
